<compile_context>
chip_gen: v6e
topology: v6e:2x2x1
jax: 0.10.0
libtpu: 0.0.40
codegen_flags: <defaults>
</compile_context>

<pallas_src>
import functools
import math

import jax
import jax.numpy as jnp
from jax import lax
from jax.experimental import pallas as pl
from jax.experimental.pallas import tpu as pltpu

_HIGHEST = jax.lax.Precision.HIGHEST


# --------------------------------------------------------------------------
# LayerNorm  (torch-style: unbiased std, a*(x-mean)/(std+eps)+b)
# --------------------------------------------------------------------------
def _layernorm_kernel(x_ref, a_ref, b_ref, o_ref, *, eps, feat):
    x = x_ref[...]                                      # (tm, d)
    mean = jnp.mean(x, axis=-1, keepdims=True)
    xc = x - mean
    # torch.Tensor.std default is the unbiased estimator (divide by d-1).
    var = jnp.sum(xc * xc, axis=-1, keepdims=True) * (1.0 / (feat - 1))
    std = jnp.sqrt(var)
    o_ref[...] = a_ref[...] * (xc / (std + eps)) + b_ref[...]


def layernorm(x2d, a, b, *, eps=1e-6, tm=8):
    n, d = x2d.shape
    assert n % tm == 0
    return pl.pallas_call(
        functools.partial(_layernorm_kernel, eps=eps, feat=d),
        out_shape=jax.ShapeDtypeStruct((n, d), x2d.dtype),
        grid_spec=pltpu.PrefetchScalarGridSpec(
            num_scalar_prefetch=0,
            grid=(n // tm,),
            in_specs=[
                pl.BlockSpec((tm, d), lambda i: (i, 0)),
                pl.BlockSpec((1, d), lambda i: (0, 0)),
                pl.BlockSpec((1, d), lambda i: (0, 0)),
            ],
            out_specs=pl.BlockSpec((tm, d), lambda i: (i, 0)),
        ),
        compiler_params=pltpu.CompilerParams(dimension_semantics=("parallel",)),
    )(x2d, a, b)


# --------------------------------------------------------------------------
# Linear:  y = act(x @ W + b) [+ residual]   (bias/act/residual fused)
# --------------------------------------------------------------------------
def _linear_kernel(x_ref, w_ref, b_ref, o_ref, *, activation):
    acc = jnp.dot(x_ref[...], w_ref[...],
                  preferred_element_type=jnp.float32, precision=_HIGHEST)
    acc = acc + b_ref[...]
    if activation == "relu":
        acc = jnp.maximum(acc, 0.0)
    o_ref[...] = acc.astype(o_ref.dtype)


def _linear_residual_kernel(x_ref, w_ref, b_ref, r_ref, o_ref):
    acc = jnp.dot(x_ref[...], w_ref[...],
                  preferred_element_type=jnp.float32, precision=_HIGHEST)
    acc = acc + b_ref[...]
    o_ref[...] = (r_ref[...] + acc).astype(o_ref.dtype)


def linear(x2d, w, b, *, activation=None, residual=None, tm=8):
    n, din = x2d.shape
    dout = w.shape[1]
    assert n % tm == 0
    cost = pl.CostEstimate(
        flops=2 * n * din * dout,
        transcendentals=0,
        bytes_accessed=4 * (n * din + din * dout + dout + n * dout
                            + (n * dout if residual is not None else 0)),
    )
    grid = (n // tm,)
    x_spec = pl.BlockSpec((tm, din), lambda i: (i, 0))
    w_spec = pl.BlockSpec((din, dout), lambda i: (0, 0))
    b_spec = pl.BlockSpec((1, dout), lambda i: (0, 0))
    out_spec = pl.BlockSpec((tm, dout), lambda i: (i, 0))
    cparams = pltpu.CompilerParams(dimension_semantics=("parallel",))

    if residual is None:
        return pl.pallas_call(
            functools.partial(_linear_kernel, activation=activation),
            out_shape=jax.ShapeDtypeStruct((n, dout), x2d.dtype),
            grid_spec=pltpu.PrefetchScalarGridSpec(
                num_scalar_prefetch=0, grid=grid,
                in_specs=[x_spec, w_spec, b_spec],
                out_specs=out_spec),
            compiler_params=cparams,
            cost_estimate=cost,
        )(x2d, w, b)

    r_spec = pl.BlockSpec((tm, dout), lambda i: (i, 0))
    return pl.pallas_call(
        _linear_residual_kernel,
        out_shape=jax.ShapeDtypeStruct((n, dout), x2d.dtype),
        grid_spec=pltpu.PrefetchScalarGridSpec(
            num_scalar_prefetch=0, grid=grid,
            in_specs=[x_spec, w_spec, b_spec, r_spec],
            out_specs=out_spec),
        compiler_params=cparams,
        cost_estimate=cost,
    )(x2d, w, b, residual)


# --------------------------------------------------------------------------
# Per-(batch, head) scaled-dot-product attention with masking
# --------------------------------------------------------------------------
def _mha_kernel(q_ref, k_ref, v_ref, m_ref, o_ref, *, scale):
    q = q_ref[...]                                      # (Lq, dk)
    k = k_ref[...]                                      # (Lk, dk)
    v = v_ref[...]                                      # (Lk, dk)
    mask = m_ref[...]                                   # (Lq, Lk)
    # q @ k^T without materializing a transpose.
    s = lax.dot_general(q, k, (((1,), (1,)), ((), ())),
                        preferred_element_type=jnp.float32,
                        precision=_HIGHEST) * scale
    s = jnp.where(mask > 0, s, -1e9)                    # masked_fill(mask==0,-1e9)
    s = s - jnp.max(s, axis=-1, keepdims=True)
    p = jnp.exp(s)
    p = p / jnp.sum(p, axis=-1, keepdims=True)
    o_ref[...] = jnp.dot(p, v, preferred_element_type=jnp.float32,
                         precision=_HIGHEST).astype(o_ref.dtype)


def mha_attention(q4, k4, v4, mask3, *, scale):
    B, H, Lq, dk = q4.shape
    Lk = k4.shape[2]
    return pl.pallas_call(
        functools.partial(_mha_kernel, scale=scale),
        out_shape=jax.ShapeDtypeStruct((B, H, Lq, dk), q4.dtype),
        grid_spec=pltpu.PrefetchScalarGridSpec(
            num_scalar_prefetch=0,
            grid=(B, H),
            in_specs=[
                pl.BlockSpec((None, None, Lq, dk), lambda b, h: (b, h, 0, 0)),
                pl.BlockSpec((None, None, Lk, dk), lambda b, h: (b, h, 0, 0)),
                pl.BlockSpec((None, None, Lk, dk), lambda b, h: (b, h, 0, 0)),
                pl.BlockSpec((None, Lq, Lk), lambda b, h: (b, 0, 0)),
            ],
            out_specs=pl.BlockSpec((None, None, Lq, dk),
                                   lambda b, h: (b, h, 0, 0)),
        ),
        compiler_params=pltpu.CompilerParams(
            dimension_semantics=("parallel", "parallel")),
    )(q4, k4, v4, mask3)


# --------------------------------------------------------------------------
# DecoderLayer forward (wrapper)
# --------------------------------------------------------------------------
def _split_heads(x2d, B, L, H, dk):
    return x2d.reshape(B, L, H, dk).transpose(0, 2, 1, 3)


def _merge_heads(x4, B, L, H, dk):
    return x4.transpose(0, 2, 1, 3).reshape(B * L, H * dk)


def decoder_layer_forward(x, memory, src_mask, tgt_mask, params):
    """x: (B, Lq, D) f32; memory: (B, Lk, D) f32; masks broadcastable to
    (B, Lq, Lq) / (B, Lq, Lk); returns (B, Lq, D) f32."""
    # TODO(synk): dropout is implemented as identity (inference mode); training
    # dropout would need an in-kernel PRNG (pltpu.prng_seed / prng_random_bits).
    B, Lq, D = x.shape
    _, Lk, _ = memory.shape
    H = params["h"]
    dk = D // H
    scale = 1.0 / math.sqrt(dk)

    x2d = x.reshape(B * Lq, D)
    m2d = memory.reshape(B * Lk, D)
    tgt_m = jnp.broadcast_to(tgt_mask, (B, Lq, Lq)).astype(jnp.float32)
    src_m = jnp.broadcast_to(src_mask, (B, Lq, Lk)).astype(jnp.float32)

    # ---- sublayer 0: masked self-attention -------------------------------
    xn = layernorm(x2d, params["ln0_a"], params["ln0_b"])
    q = linear(xn, params["sa_wq"], params["sa_bq"])
    k = linear(xn, params["sa_wk"], params["sa_bk"])
    v = linear(xn, params["sa_wv"], params["sa_bv"])
    attn = mha_attention(_split_heads(q, B, Lq, H, dk),
                         _split_heads(k, B, Lq, H, dk),
                         _split_heads(v, B, Lq, H, dk),
                         tgt_m, scale=scale)
    x2d = linear(_merge_heads(attn, B, Lq, H, dk),
                 params["sa_wo"], params["sa_bo"], residual=x2d)

    # ---- sublayer 1: cross-attention over encoder memory -----------------
    xn = layernorm(x2d, params["ln1_a"], params["ln1_b"])
    q = linear(xn, params["ca_wq"], params["ca_bq"])
    k = linear(m2d, params["ca_wk"], params["ca_bk"])
    v = linear(m2d, params["ca_wv"], params["ca_bv"])
    attn = mha_attention(_split_heads(q, B, Lq, H, dk),
                         _split_heads(k, B, Lk, H, dk),
                         _split_heads(v, B, Lk, H, dk),
                         src_m, scale=scale)
    x2d = linear(_merge_heads(attn, B, Lq, H, dk),
                 params["ca_wo"], params["ca_bo"], residual=x2d)

    # ---- sublayer 2: position-wise feed-forward ---------------------------
    xn = layernorm(x2d, params["ln2_a"], params["ln2_b"])
    h = linear(xn, params["ff_w1"], params["ff_b1"], activation="relu")
    x2d = linear(h, params["ff_w2"], params["ff_b2"], residual=x2d)

    return x2d.reshape(B, Lq, D)


# --------------------------------------------------------------------------
# Pure-JAX reference (mirrors the PyTorch module, dropout = identity)
# --------------------------------------------------------------------------
def _ref_layernorm(x, a, b, eps=1e-6):
    mean = jnp.mean(x, axis=-1, keepdims=True)
    var = jnp.sum((x - mean) ** 2, axis=-1, keepdims=True) / (x.shape[-1] - 1)
    std = jnp.sqrt(var)
    return a * (x - mean) / (std + eps) + b


def _ref_mha(q2d, k2d, v2d, mask3, B, Lq, Lk, H, dk):
    q = q2d.reshape(B, Lq, H, dk).transpose(0, 2, 1, 3)
    k = k2d.reshape(B, Lk, H, dk).transpose(0, 2, 1, 3)
    v = v2d.reshape(B, Lk, H, dk).transpose(0, 2, 1, 3)
    s = jnp.einsum("bhqd,bhkd->bhqk", q, k, precision=_HIGHEST) / math.sqrt(dk)
    s = jnp.where(mask3[:, None, :, :] > 0, s, -1e9)
    p = jax.nn.softmax(s, axis=-1)
    o = jnp.einsum("bhqk,bhkd->bhqd", p, v, precision=_HIGHEST)
    return o.transpose(0, 2, 1, 3).reshape(B * Lq, H * dk)


def ref_decoder_layer(x, memory, src_mask, tgt_mask, params):
    B, Lq, D = x.shape
    _, Lk, _ = memory.shape
    H = params["h"]
    dk = D // H

    def lin(z, w, b):
        return jnp.dot(z, w, precision=_HIGHEST) + b

    x2d = x.reshape(B * Lq, D)
    m2d = memory.reshape(B * Lk, D)
    tgt_m = jnp.broadcast_to(tgt_mask, (B, Lq, Lq))
    src_m = jnp.broadcast_to(src_mask, (B, Lq, Lk))

    xn = _ref_layernorm(x2d, params["ln0_a"], params["ln0_b"])
    q = lin(xn, params["sa_wq"], params["sa_bq"])
    k = lin(xn, params["sa_wk"], params["sa_bk"])
    v = lin(xn, params["sa_wv"], params["sa_bv"])
    a = _ref_mha(q, k, v, tgt_m, B, Lq, Lq, H, dk)
    x2d = x2d + lin(a, params["sa_wo"], params["sa_bo"])

    xn = _ref_layernorm(x2d, params["ln1_a"], params["ln1_b"])
    q = lin(xn, params["ca_wq"], params["ca_bq"])
    k = lin(m2d, params["ca_wk"], params["ca_bk"])
    v = lin(m2d, params["ca_wv"], params["ca_bv"])
    a = _ref_mha(q, k, v, src_m, B, Lq, Lk, H, dk)
    x2d = x2d + lin(a, params["ca_wo"], params["ca_bo"])

    xn = _ref_layernorm(x2d, params["ln2_a"], params["ln2_b"])
    h = jnp.maximum(lin(xn, params["ff_w1"], params["ff_b1"]), 0.0)
    x2d = x2d + lin(h, params["ff_w2"], params["ff_b2"])
    return x2d.reshape(B, Lq, D)


# --------------------------------------------------------------------------
if __name__ == "__main__":
    D, H, DFF = 128, 4, 256           # d_model, heads, ffn hidden
    B, LQ, LK = 2, 8, 16              # batch, target len, source (memory) len

    key = jax.random.PRNGKey(0)
    keys = list(jax.random.split(key, 32))
    kit = iter(keys)

    def lin_init(k, fan_in, fan_out):
        kw, kb = jax.random.split(k)
        bound = 1.0 / math.sqrt(fan_in)
        w = jax.random.uniform(kw, (fan_in, fan_out), jnp.float32, -bound, bound)
        bb = jax.random.uniform(kb, (1, fan_out), jnp.float32, -bound, bound)
        return w, bb

    params = {"h": H}
    for pre in ("sa", "ca"):
        for name in ("wq", "wk", "wv", "wo"):
            w, bb = lin_init(next(kit), D, D)
            params[f"{pre}_{name}"] = w
            params[f"{pre}_b{name[-1]}"] = bb
    params["ff_w1"], params["ff_b1"] = lin_init(next(kit), D, DFF)
    params["ff_w2"], params["ff_b2"] = lin_init(next(kit), DFF, D)
    for i in range(3):
        params[f"ln{i}_a"] = 1.0 + 0.1 * jax.random.normal(next(kit), (1, D), jnp.float32)
        params[f"ln{i}_b"] = 0.1 * jax.random.normal(next(kit), (1, D), jnp.float32)

    x = jax.random.normal(next(kit), (B, LQ, D), dtype=jnp.float32)
    memory = jax.random.normal(next(kit), (B, LK, D), dtype=jnp.float32)

    # Causal (subsequent-position) mask for self-attention.
    tgt_mask = jnp.broadcast_to(
        jnp.tril(jnp.ones((LQ, LQ), jnp.float32))[None], (B, LQ, LQ))
    # Source padding mask: batch 1 has its last 3 encoder positions masked out.
    src_valid = jnp.array([LK, LK - 3], jnp.int32)
    src_mask = (jnp.arange(LK)[None, :] < src_valid[:, None]).astype(jnp.float32)
    src_mask = jnp.broadcast_to(src_mask[:, None, :], (B, LQ, LK))

    y = decoder_layer_forward(x, memory, src_mask, tgt_mask, params)
    y = jax.block_until_ready(y)

    ref = ref_decoder_layer(x, memory, src_mask, tgt_mask, params)
    assert y.shape == (B, LQ, D)
    assert y.dtype == jnp.float32
    max_err = float(jnp.max(jnp.abs(y - ref)))
    assert jnp.allclose(y, ref, atol=1e-4, rtol=1e-4), f"max abs err {max_err}"

    print("KERNEL_OK")
</pallas_src>

<mosaic_0001>
module attributes {stable_mosaic.version = 11 : i64} {
  func.func @_layernorm_kernel(%arg0: i32, %arg1: memref<8x128xf32, #tpu.memory_space<vmem>>, %arg2: memref<1x128xf32, #tpu.memory_space<vmem>>, %arg3: memref<1x128xf32, #tpu.memory_space<vmem>>, %arg4: memref<8x128xf32, #tpu.memory_space<vmem>>) attributes {dimension_semantics = [#tpu.dimension_semantics<parallel>], iteration_bounds = array<i64: 2>, scalar_prefetch = 0 : i64, scratch_operands = 0 : i64, tpu.core_type = #tpu.core_type<tc>, window_params = [{transform_indices = @transform_0, window_bounds = array<i64: 8, 128>}, {pipeline_mode = #tpu.pipeline_mode<synchronous>, transform_indices = @transform_1, window_bounds = array<i64: 1, 128>}, {pipeline_mode = #tpu.pipeline_mode<synchronous>, transform_indices = @transform_2, window_bounds = array<i64: 1, 128>}, {transform_indices = @transform_3, window_bounds = array<i64: 8, 128>}]} {
    %c0 = arith.constant 0 : index
    %c0_0 = arith.constant 0 : index
    %0 = vector.load %arg1[%c0, %c0_0] : memref<8x128xf32, #tpu.memory_space<vmem>>, vector<8x128xf32>
    %cst = arith.constant dense<0.000000e+00> : vector<8xf32>
    %1 = vector.multi_reduction <add>, %0, %cst [1] : vector<8x128xf32> to vector<8xf32>
    %2 = vector.shape_cast %1 : vector<8xf32> to vector<8x1xf32>
    %cst_1 = arith.constant 1.280000e+02 : f32
    %3 = vector.broadcast %cst_1 : f32 to vector<8x1xf32>
    %4 = arith.divf %2, %3 : vector<8x1xf32>
    %5 = vector.broadcast %4 : vector<8x1xf32> to vector<8x128xf32>
    %6 = arith.subf %0, %5 : vector<8x128xf32>
    %7 = arith.mulf %6, %6 : vector<8x128xf32>
    %cst_2 = arith.constant dense<0.000000e+00> : vector<8xf32>
    %8 = vector.multi_reduction <add>, %7, %cst_2 [1] : vector<8x128xf32> to vector<8xf32>
    %9 = vector.shape_cast %8 : vector<8xf32> to vector<8x1xf32>
    %cst_3 = arith.constant 0.00787401571 : f32
    %10 = vector.broadcast %cst_3 : f32 to vector<8x1xf32>
    %11 = arith.mulf %9, %10 : vector<8x1xf32>
    %12 = math.sqrt %11 : vector<8x1xf32>
    %c0_4 = arith.constant 0 : index
    %c0_5 = arith.constant 0 : index
    %13 = vector.load %arg2[%c0_4, %c0_5] : memref<1x128xf32, #tpu.memory_space<vmem>>, vector<1x128xf32>
    %cst_6 = arith.constant 9.99999997E-7 : f32
    %14 = vector.broadcast %cst_6 : f32 to vector<8x1xf32>
    %15 = arith.addf %12, %14 : vector<8x1xf32>
    %16 = vector.broadcast %15 : vector<8x1xf32> to vector<8x128xf32>
    %17 = arith.divf %6, %16 : vector<8x128xf32>
    %18 = vector.broadcast %13 : vector<1x128xf32> to vector<8x128xf32>
    %19 = arith.mulf %18, %17 : vector<8x128xf32>
    %c0_7 = arith.constant 0 : index
    %c0_8 = arith.constant 0 : index
    %20 = vector.load %arg3[%c0_7, %c0_8] : memref<1x128xf32, #tpu.memory_space<vmem>>, vector<1x128xf32>
    %21 = vector.broadcast %20 : vector<1x128xf32> to vector<8x128xf32>
    %22 = arith.addf %19, %21 : vector<8x128xf32>
    %c0_9 = arith.constant 0 : index
    %c0_10 = arith.constant 0 : index
    %23 = vector.load %arg4[%c0_9, %c0_10] : memref<8x128xf32, #tpu.memory_space<vmem>>, vector<8x128xf32>
    tpu.vector_store %arg4[%c0_9, %c0_10], %22 {strides = array<i32>} : memref<8x128xf32, #tpu.memory_space<vmem>>, vector<8x128xf32>,
    return
  }
  func.func @transform_0(%arg0: i32) -> (i32, i32) {
    %c0_i32 = arith.constant 0 : i32
    %c0_i32_0 = arith.constant 0 : i32
    return %arg0, %c0_i32 : i32, i32
  }
  func.func @transform_1(%arg0: i32) -> (i32, i32) {
    %c0_i32 = arith.constant 0 : i32
    %c0_i32_0 = arith.constant 0 : i32
    %c0_i32_1 = arith.constant 0 : i32
    return %c0_i32, %c0_i32_0 : i32, i32
  }
  func.func @transform_2(%arg0: i32) -> (i32, i32) {
    %c0_i32 = arith.constant 0 : i32
    %c0_i32_0 = arith.constant 0 : i32
    %c0_i32_1 = arith.constant 0 : i32
    return %c0_i32, %c0_i32_0 : i32, i32
  }
  func.func @transform_3(%arg0: i32) -> (i32, i32) {
    %c0_i32 = arith.constant 0 : i32
    %c0_i32_0 = arith.constant 0 : i32
    return %arg0, %c0_i32 : i32, i32
  }
}

</mosaic_0001>

<llo_original>
// kernel: tpu_custom_call.1
$region0: #{tpu_custom_call.1}
  #allocation0 [shape = 'u32[]', space=smem, size = 0x4, offset = 0x4, fixed_abs, tag = 'smem constant byte address 0x4 - core index']
  #allocation1 [shape = 'u32[144,128]{1,0:T(1,128)}', space=vmem, size = 0x12000, scoped, tag = 'internal scratch']
  %s0 = inlined_call_operand.hbm [shape: f32[16,128], index: 0, kind: input, shape index: {}]
  %s1 = inlined_call_operand.vmem [shape: f32[1,128], index: 1, kind: input, shape index: {}]
  %s2 = inlined_call_operand.vmem [shape: f32[1,128], index: 2, kind: input, shape index: {}]
  %s3 = inlined_call_operand.hbm [shape: f32[16,128], index: 3, kind: output, shape index: {}]
  %s4 = sld [smem:[#allocation0]]
  $region49: #{tpu_custom_call.1} parent=0
    _
  %s6 = ssub.s32 1, %s4
  %s7 = scalar_select 0, %s6, %s4
  $region1: #{tpu_custom_call.1} parent=0
    #allocation2 [shape = 'u8[8192]{0}', space=vmem, size = 0x2000, scoped, tag = 'input window, operand 0']
    #allocation3 [shape = 's32[2]{0}', space=sflag, size = 0x8, scoped, tag = 'scoped memory for tpu_custom_call.1']
    #allocation4 [shape = 's32[2]{0}', space=sflag, size = 0x8, scoped, tag = 'scoped memory for tpu_custom_call.1']
    #allocation5 [shape = 'u8[8192]{0}', space=vmem, size = 0x2000, scoped, tag = 'output window, operand 0']
    %8 = vsyncpa [#allocation3], 0
    %s9 = scalar_lea.sflag [#allocation3], 1
    %10 = vsyncpa %s9, 0
    %11 = vsyncpa [#allocation4], 0
    %s12 = scalar_lea.sflag [#allocation4], 1
    %13 = vsyncpa %s12, 0
    loop: start=0, step=1, limit=4
    $region2: #{tpu_custom_call.1} parent=1 // loop_pre_header
      _
    $region3: #{tpu_custom_call.1} parent=1 // loop_header
      %s15 = sphi 0, %s19
      %p16 = scmp.ge.s32.totalorder %s15, 4
      %s25 = sphi 0, %s27
      %s28 = sphi 0, %s25
      %s29 = sphi 0, %s28
      %s45 = sphi 0, %s29
      %s49 = sphi 0, %s49
      %s51 = sphi 0, %s49
      %s52 = sphi 0, %s51
      %s66 = sphi 0, %s52
      %s70 = sphi 0, %s70
      %s72 = sphi 0, %s70
      %s73 = sphi 0, %s72
      %s87 = sphi 0, %s73
      %s93 = sphi 0, %s95
      %s96 = sphi 0, %s93
      %s97 = sphi 0, %s96
      %s113 = sphi 0, %s97
    $region4: #{tpu_custom_call.1} parent=1 // loop_header_branch
      %18 = sbr.rel (%p16) target = $region8
    $region5: #{tpu_custom_call.1} parent=1 // loop_body
      %s20 = ssub.s32 %s15, 1
      %s21 = ssub.s32 %s15, 2
      %s22 = sadd.s32 %s15, 1
      %s23 = ssub.s32 %s15, %s22
      %p24 = scmp.eq.s32.totalorder %s23, 0
      %s26 = sadd.s32 %s25, 1
      %s27 = scalar_select %p24, %s25, %s26
      %p30 = pneg %p24
      %p31 = scmp.eq.s32.totalorder %s15, 1
      %p32 = por %p30, %p31
      %p33 = scmp.ne.s32.totalorder %s25, %s28
      %p34 = scmp.eq.s32.totalorder %s15, 0
      %p35 = por %p33, %p34
      %p36 = scmp.ne.s32.totalorder %s25, %s28
      %p37 = scmp.eq.s32.totalorder %s20, 1
      %p38 = por %p36, %p37
      %p39 = scmp.ne.s32.totalorder %s28, %s29
      %p40 = scmp.eq.s32.totalorder %s20, 0
      %p41 = por %p39, %p40
      %p42 = scmp.ne.s32.totalorder %s28, %s29
      %p43 = scmp.eq.s32.totalorder %s21, 1
      %p44 = por %p42, %p43
      %p46 = scmp.ne.s32.totalorder %s29, %s45
      %p47 = scmp.eq.s32.totalorder %s21, 0
      %p48 = por %p46, %p47
      %s50 = sadd.s32 %s49, 1
      %p53 = scmp.eq.s32.totalorder %s15, 1
      %p54 = scmp.ne.s32.totalorder %s49, %s51
      %p55 = scmp.eq.s32.totalorder %s15, 0
      %p56 = por %p54, %p55
      %p57 = scmp.ne.s32.totalorder %s49, %s51
      %p58 = scmp.eq.s32.totalorder %s20, 1
      %p59 = por %p57, %p58
      %p60 = scmp.ne.s32.totalorder %s51, %s52
      %p61 = scmp.eq.s32.totalorder %s20, 0
      %p62 = por %p60, %p61
      %p63 = scmp.ne.s32.totalorder %s51, %s52
      %p64 = scmp.eq.s32.totalorder %s21, 1
      %p65 = por %p63, %p64
      %p67 = scmp.ne.s32.totalorder %s52, %s66
      %p68 = scmp.eq.s32.totalorder %s21, 0
      %p69 = por %p67, %p68
      %s71 = sadd.s32 %s70, 1
      %p74 = scmp.eq.s32.totalorder %s15, 1
      %p75 = scmp.ne.s32.totalorder %s70, %s72
      %p76 = scmp.eq.s32.totalorder %s15, 0
      %p77 = por %p75, %p76
      %p78 = scmp.ne.s32.totalorder %s70, %s72
      %p79 = scmp.eq.s32.totalorder %s20, 1
      %p80 = por %p78, %p79
      %p81 = scmp.ne.s32.totalorder %s72, %s73
      %p82 = scmp.eq.s32.totalorder %s20, 0
      %p83 = por %p81, %p82
      %p84 = scmp.ne.s32.totalorder %s72, %s73
      %p85 = scmp.eq.s32.totalorder %s21, 1
      %p86 = por %p84, %p85
      %p88 = scmp.ne.s32.totalorder %s73, %s87
      %p89 = scmp.eq.s32.totalorder %s21, 0
      %p90 = por %p88, %p89
      %s91 = ssub.s32 %s15, %s22
      %p92 = scmp.eq.s32.totalorder %s91, 0
      %s94 = sadd.s32 %s93, 1
      %s95 = scalar_select %p92, %s93, %s94
      %p98 = pneg %p92
      %p99 = scmp.eq.s32.totalorder %s15, 1
      %p100 = por %p98, %p99
      %p101 = scmp.ne.s32.totalorder %s93, %s96
      %p102 = scmp.eq.s32.totalorder %s15, 0
      %p103 = por %p101, %p102
      %p104 = scmp.ne.s32.totalorder %s93, %s96
      %p105 = scmp.eq.s32.totalorder %s20, 1
      %p106 = por %p104, %p105
      %p107 = scmp.ne.s32.totalorder %s96, %s97
      %p108 = scmp.eq.s32.totalorder %s20, 0
      %p109 = por %p107, %p108
      %p110 = scmp.ne.s32.totalorder %s96, %s97
      %p111 = scmp.eq.s32.totalorder %s21, 1
      %p112 = por %p110, %p111
      %p114 = scmp.ne.s32.totalorder %s97, %s113
      %p115 = scmp.eq.s32.totalorder %s21, 0
      %p116 = por %p114, %p115
      %p117 = scmp.le.s32.totalorder 1, %s15
      %p118 = scmp.lt.s32.totalorder %s15, 3
      %p119 = pnand %p117, %p118
      %p120 = pneg %p119
      // Predicated region
      $region9: #{tpu_custom_call.1} parent=5 // pred_check
        _
      $region10: #{tpu_custom_call.1} parent=5 // pred_check_branch
        %122 = sbr.rel (%p119) target = $region12
      $region11: #{tpu_custom_call.1} parent=5 // pred_region
        %s123 = ssub.s32 %s15, 1
        // Predicated region
        $region13: #{tpu_custom_call.1} parent=11 // pred_check
          %p124 = pneg %p62
        $region14: #{tpu_custom_call.1} parent=11 // pred_check_branch
          %126 = sbr.rel (%p124) target = $region16
        $region15: #{tpu_custom_call.1} parent=11 // pred_region
          _
        $region16: #{tpu_custom_call.1} parent=11 // pred_fallthru
          _
        // Predicated region
        $region17: #{tpu_custom_call.1} parent=11 // pred_check
          %p127 = pneg %p83
        $region18: #{tpu_custom_call.1} parent=11 // pred_check_branch
          %129 = sbr.rel (%p127) target = $region20
        $region19: #{tpu_custom_call.1} parent=11 // pred_region
          _
        $region20: #{tpu_custom_call.1} parent=11 // pred_fallthru
          _
      $region12: #{tpu_custom_call.1} parent=5 // pred_fallthru
        _
      %p130 = scmp.lt.s32.totalorder %s15, 2
      // Predicated region
      $region21: #{tpu_custom_call.1} parent=5 // pred_check
        %p131 = pneg %p130
      $region22: #{tpu_custom_call.1} parent=5 // pred_check_branch
        %133 = sbr.rel (%p131) target = $region24
      $region23: #{tpu_custom_call.1} parent=5 // pred_region
        // Predicated region
        $region25: #{tpu_custom_call.1} parent=23 // pred_check
          %p134 = pneg %p35
        $region26: #{tpu_custom_call.1} parent=23 // pred_check_branch
          %136 = sbr.rel (%p134) target = $region28
        $region27: #{tpu_custom_call.1} parent=23 // pred_region
          %s137 = sand.u32 %s25, 1
          %s138 = scalar_lea.sflag [#allocation3], %s137
          %s139 = sand.u32 %s25, 1
          %s140 = smul.addr %s139, 8
          %s141 = scalar_lea.vmem [#allocation2], %s140
          %s143 = ssub.s32 128, 128
          %144 = vsyncadd %s138, %s143
          %s145 = smul.addr %s15, 128
          %s146 = scalar_lea.hbm %s0, %s145
          %s148 = sshll.u32 %s141, 4
          %s149 = int_to_ptr.vmem [resolvable:$true] %s148
          %151 = dma.hbm_to_vmem [thread:$0]  %s146, 128, %s149, %s138
        $region28: #{tpu_custom_call.1} parent=23 // pred_fallthru
          _
      $region24: #{tpu_custom_call.1} parent=5 // pred_fallthru
        _
      %p152 = scmp.le.s32.totalorder 1, %s15
      %p153 = scmp.lt.s32.totalorder %s15, 3
      %p154 = pnand %p152, %p153
      %p155 = pneg %p154
      // Predicated region
      $region29: #{tpu_custom_call.1} parent=5 // pred_check
        _
      $region30: #{tpu_custom_call.1} parent=5 // pred_check_branch
        %157 = sbr.rel (%p154) target = $region32
      $region31: #{tpu_custom_call.1} parent=5 // pred_region
        %s158 = ssub.s32 %s15, 1
        %s159 = sand.u32 %s28, 1
        %s160 = scalar_lea.sflag [#allocation3], %s159
        %s161 = sand.u32 %s28, 1
        %s162 = smul.addr %s161, 8
        %s163 = scalar_lea.vmem [#allocation2], %s162
        // Predicated region
        $region33: #{tpu_custom_call.1} parent=31 // pred_check
          %p164 = pneg %p41
        $region34: #{tpu_custom_call.1} parent=31 // pred_check_branch
          %166 = sbr.rel (%p164) target = $region36
        $region35: #{tpu_custom_call.1} parent=31 // pred_region
          %167 = dma.done %s160, 128
        $region36: #{tpu_custom_call.1} parent=31 // pred_fallthru
          _
        %s168 = sand.u32 %s28, 1
        %s169 = scalar_lea.sflag [#allocation3], %s168
        %s170 = sand.u32 %s28, 1
        %s171 = smul.addr %s170, 8
        %s172 = scalar_lea.vmem [#allocation2], %s171
        %p173 = pneg %p41
        %p174 = pneg %p38
        %p175 = pneg %p62
        %p176 = pneg %p59
        %p177 = pneg %p83
        %p178 = pneg %p80
        %p179 = pneg %p109
        %p180 = pneg %p106
        %s181 = sand.u32 %s96, 1
        %s182 = scalar_lea.sflag [#allocation4], %s181
        %s183 = sand.u32 %s96, 1
        %s184 = smul.addr %s183, 8
        %s185 = scalar_lea.vmem [#allocation5], %s184
        %v186 = vld [vmem:[%s163] sm:$0xff]
        %187 = vadd.xlane.f32.xlu0 %v186
        %v188 = vpop.xlane.xlu0 %187
        %v189 = vrcp.pop 128.0
        %v190 = vmul.f32 %v188, %v189
        %v191 = vsub.f32 %v186, %v190
        %v192 = vmul.f32 %v191, %v191
        %193 = vadd.xlane.f32.xlu0 %v192
        %v194 = vpop.xlane.xlu0 %193
        %v195 = vmul.f32 %v194, 0.007874016
        %v196 = vrsqrt.pop %v195
        %v197 = vmul.f32 %v195, %v196
        %vm198 = vcmp.eq.f32.partialorder %v195, inf
        %v199 = vsel %vm198, %v195, %v197
        %vm200 = vcmp.eq.f32.partialorder %v195, 0.0
        %v201 = vand.u32 %v195, 2147483648
        %v202 = vsel %vm200, %v201, %v199
        %v203 = vld [vmem:[%s1] sm:$0x1]
        %v204 = vadd.f32 %v202, 1e-06
        %v205 = vrcp.pop %v204
        %v206 = vmul.f32 %v191, %v205
        %v208 = vlaneseq
        %v209 = vshrl.u32 %v208, 7
        %v210 = vsub.s32 0, %v209
        %v211 = vrot.slane %v203, %v210
        %v213 = vmul.f32 %v211, %v206
        %v214 = vld [vmem:[%s2] sm:$0x1]
        %v216 = vlaneseq
        %v217 = vshrl.u32 %v216, 7
        %v218 = vsub.s32 0, %v217
        %v219 = vrot.slane %v214, %v218
        %v221 = vadd.f32 %v213, %v219
        %222 = vst [vmem:[%s185] sm:$0xff] %v221
        %s223 = sand.u32 %s96, 1
        %s224 = scalar_lea.sflag [#allocation4], %s223
        %s225 = sand.u32 %s96, 1
        %s226 = smul.addr %s225, 8
        %s227 = scalar_lea.vmem [#allocation5], %s226
        // Predicated region
        $region37: #{tpu_custom_call.1} parent=31 // pred_check
          %p228 = pneg %p106
        $region38: #{tpu_custom_call.1} parent=31 // pred_check_branch
          %230 = sbr.rel (%p228) target = $region40
        $region39: #{tpu_custom_call.1} parent=31 // pred_region
          %s232 = ssub.s32 128, 128
          %233 = vsyncadd %s224, %s232
          %s234 = smul.addr %s20, 128
          %s235 = scalar_lea.hbm %s3, %s234
          %s237 = sshll.u32 %s227, 4
          %s238 = int_to_ptr.vmem [resolvable:$true] %s237
          %240 = dma.vmem_to_hbm [thread:$0]  %s238, 128, %s235, %s224
        $region40: #{tpu_custom_call.1} parent=31 // pred_fallthru
          _
      $region32: #{tpu_custom_call.1} parent=5 // pred_fallthru
        _
      %p241 = scmp.le.s32.totalorder 2, %s15
      // Predicated region
      $region41: #{tpu_custom_call.1} parent=5 // pred_check
        %p242 = pneg %p241
      $region42: #{tpu_custom_call.1} parent=5 // pred_check_branch
        %244 = sbr.rel (%p242) target = $region44
      $region43: #{tpu_custom_call.1} parent=5 // pred_region
        %s245 = ssub.s32 %s15, 2
        // Predicated region
        $region45: #{tpu_custom_call.1} parent=43 // pred_check
          %p246 = pneg %p112
        $region46: #{tpu_custom_call.1} parent=43 // pred_check_branch
          %248 = sbr.rel (%p246) target = $region48
        $region47: #{tpu_custom_call.1} parent=43 // pred_region
          %s249 = sand.u32 %s97, 1
          %s250 = scalar_lea.sflag [#allocation4], %s249
          %s251 = sand.u32 %s97, 1
          %s252 = smul.addr %s251, 8
          %s253 = scalar_lea.vmem [#allocation5], %s252
          %254 = dma.done %s250, 128
        $region48: #{tpu_custom_call.1} parent=43 // pred_fallthru
          _
      $region44: #{tpu_custom_call.1} parent=5 // pred_fallthru
        _
    $region6: #{tpu_custom_call.1} parent=1 // loop_footer
      %s19 = sadd.s32 1, %s15
    $region7: #{tpu_custom_call.1} parent=1 // loop_footer_branch
      %14 = sbr.rel target = $region3
    $region8: #{tpu_custom_call.1} parent=1 // loop_exit
      _
    %255 = vsyncpa [#allocation3], 1
    %s256 = scalar_lea.sflag [#allocation3], 1
    %257 = vsyncpa %s256, 1
    %258 = vsyncpa [#allocation4], 1
    %s259 = scalar_lea.sflag [#allocation4], 1
    %260 = vsyncpa %s259, 1

</llo_original>
